<compile_context>
chip_gen: v7x
topology: tpu7x:2x2x1
jax: 0.10.0
libtpu: 0.0.40
codegen_flags: <defaults>
</compile_context>

<pallas_src>
import functools

import jax
import jax.numpy as jnp
from jax.experimental import pallas as pl
from jax.experimental.pallas import tpu as pltpu


def _round_up(v, m):
    return ((v + m - 1) // m) * m


def _graph_conv_kernel(adj_ref, x_ref, w_ref, o_ref, *, xw_first, use_bf16):
    # adj_ref: (TB, Np, Np), x_ref: (TB, Np, Dip), w_ref: (Dip, Dop),
    # o_ref: (TB, Np, Dop)
    tb, n, dip = x_ref.shape
    dop = w_ref.shape[1]

    adj = adj_ref[...]
    x = x_ref[...]
    w = w_ref[...]
    if use_bf16:
        adj = adj.astype(jnp.bfloat16)
        x = x.astype(jnp.bfloat16)
        w = w.astype(jnp.bfloat16)

    if xw_first:
        # One big lane-dense GEMM shared across the packed batches, then the
        # graph aggregation in the (narrower) output feature dim.
        xw = jnp.dot(x.reshape(tb * n, dip), w,
                     preferred_element_type=jnp.float32)
        xw = xw.reshape(tb, n, dop)
        if use_bf16:
            xw = xw.astype(jnp.bfloat16)
        y = jnp.einsum("bij,bjd->bid", adj, xw,
                       preferred_element_type=jnp.float32)
    else:
        # D_in < D_out: aggregate first (narrower contraction), then one big
        # shared @W GEMM.
        y = jnp.einsum("bij,bjd->bid", adj, x,
                       preferred_element_type=jnp.float32)
        if use_bf16:
            y = y.astype(jnp.bfloat16)
        y = jnp.dot(y.reshape(tb * n, dip), w,
                    preferred_element_type=jnp.float32)
        y = y.reshape(tb, n, dop)

    o_ref[...] = y.astype(o_ref.dtype)


def _pick_tb(B, Np, per_batch_bytes, fixed_bytes, budget_bytes,
             row_floor=256, row_cap=1024, min_steps=2):
    """Pick how many batches to pack per grid step.

    Preference (lexicographic):
      1. keep at least `min_steps` grid steps when B allows it (v7x megacore),
      2. reach the `row_floor` rows that fill one MXU pass for the @W GEMM,
      3. minimize zero-padded batches (Bp - B waste),
      4. pack as many rows as the VMEM budget / row cap allow.
    """
    best_t, best_key = 1, None
    for t in range(1, B + 1):
        rows = t * Np
        ws = fixed_bytes + t * per_batch_bytes
        if t > 1 and (ws > budget_bytes or rows > row_cap):
            continue
        steps = -(-B // t)
        waste = steps * t - B
        key = (steps >= min(min_steps, B),
               min(rows, row_floor),
               -waste,
               min(rows, row_cap))
        if best_key is None or key > best_key:
            best_t, best_key = t, key
    return best_t


def graph_conv(x, adj, weight, *, use_bf16=False):
    """y = adj @ x @ weight, batched over the leading dim (GraphConv.forward)."""
    B, N, D_in = x.shape
    D_out = weight.shape[1]
    assert adj.shape == (B, N, N)
    assert weight.shape == (D_in, D_out)

    LANE, SUBLANE = 128, 8
    # Lane-dense contraction dim: pad N to 128 when the adjacency blow-up is
    # modest; for tiny graphs (N < 64) the (128/N)^2 extra adj bytes outweigh
    # the MXU-fill gain, so only 8-pad the sublane dim there.
    Np = _round_up(N, LANE) if N >= 64 else _round_up(N, SUBLANE)
    Dip = _round_up(D_in, LANE)
    Dop = _round_up(D_out, LANE)

    # ---- VMEM working-set accounting (block sizes include the implicit
    # (8, 128) rounding of the last two dims once resident in VMEM) ----
    np8 = _round_up(Np, SUBLANE)
    np128 = _round_up(Np, LANE)
    adj_blk = np8 * np128 * 4
    x_blk = np8 * Dip * 4
    out_blk = np8 * Dop * 4
    # Double-buffered pipelined blocks + f32 xw/y intermediates per packed batch.
    per_batch_bytes = 2 * (adj_blk + x_blk + out_blk) + 2 * np8 * Dop * 4
    # Resident weight block (single-buffered: constant index_map, never re-DMA'd).
    fixed_bytes = _round_up(Dip, SUBLANE) * Dop * 4

    # Per-generation budget (physical VMEM: 128 MiB v5e/v6e, 64 MiB v7x).
    try:
        vmem_capacity = int(pltpu.get_tpu_info().vmem_capacity_bytes)
    except Exception:  # interpret mode / older API: assume the smallest (v7x)
        vmem_capacity = 64 * 1024 * 1024
    if vmem_capacity <= 64 * 1024 * 1024:
        budget_bytes = 24 * 1024 * 1024   # v7x: headroom for 2 TCs + temps
    else:
        budget_bytes = 80 * 1024 * 1024   # v5e / v6e (128 MiB physical)

    TB = _pick_tb(B, Np, per_batch_bytes, fixed_bytes, budget_bytes)
    Bp = _round_up(B, TB)

    working_set = fixed_bytes + TB * per_batch_bytes
    vmem_limit = int(min(vmem_capacity * 7 // 8,
                         max(working_set + working_set // 4 + (4 << 20),
                             32 * 1024 * 1024)))

    # ---- Wrapper-side casts / pads: only when actually needed (zero padding
    # is exact: padded adj rows/cols and W rows/cols contribute 0). ----
    xj = x.astype(jnp.float32)
    adjj = adj.astype(jnp.float32)
    wj = weight.astype(jnp.float32)
    if (Bp, Np, Dip) != (B, N, D_in):
        xj = jnp.pad(xj, ((0, Bp - B), (0, Np - N), (0, Dip - D_in)))
    if (Bp, Np) != (B, N):
        adjj = jnp.pad(adjj, ((0, Bp - B), (0, Np - N), (0, Np - N)))
    if (Dip, Dop) != (D_in, D_out):
        wj = jnp.pad(wj, ((0, Dip - D_in), (0, Dop - D_out)))

    xw_first = D_out <= D_in
    kernel = functools.partial(_graph_conv_kernel, xw_first=xw_first,
                               use_bf16=use_bf16)

    def _call(single_buffer_weight):
        if single_buffer_weight:
            w_spec = pl.BlockSpec((Dip, Dop), lambda g: (0, 0),
                                  pipeline_mode=pl.Buffered(1))
        else:
            w_spec = pl.BlockSpec((Dip, Dop), lambda g: (0, 0))
        return pl.pallas_call(
            kernel,
            out_shape=jax.ShapeDtypeStruct((Bp, Np, Dop), jnp.float32),
            grid_spec=pltpu.PrefetchScalarGridSpec(
                num_scalar_prefetch=0,
                grid=(Bp // TB,),
                in_specs=[
                    pl.BlockSpec((TB, Np, Np), lambda g: (g, 0, 0)),
                    pl.BlockSpec((TB, Np, Dip), lambda g: (g, 0, 0)),
                    w_spec,  # resident weight, constant index_map
                ],
                out_specs=pl.BlockSpec((TB, Np, Dop), lambda g: (g, 0, 0)),
            ),
            compiler_params=pltpu.CompilerParams(
                dimension_semantics=("parallel",),
                vmem_limit_bytes=vmem_limit,
            ),
        )(adjj, xj, wj)

    try:
        out_p = _call(True)
    except Exception:
        # Fallback if this JAX build rejects pipeline_mode=pl.Buffered(1).
        out_p = _call(False)

    if (Bp, Np, Dop) != (B, N, D_out):
        out_p = out_p[:B, :N, :D_out]
    return out_p


if __name__ == "__main__":
    # Small deterministic example consistent with GraphConv(input_dim, output_dim)
    B, N, D_in, D_out = 2, 16, 32, 32

    key = jax.random.PRNGKey(0)
    k_x, k_adj, k_w = jax.random.split(key, 3)

    x = jax.random.normal(k_x, (B, N, D_in), dtype=jnp.float32)
    adj = jax.random.normal(k_adj, (B, N, N), dtype=jnp.float32)
    # nn.Parameter(torch.FloatTensor(D_in, D_out)) is uninitialized memory in
    # the original module; initialize deterministically here instead.
    weight = jax.random.normal(k_w, (D_in, D_out), dtype=jnp.float32) * 0.1

    out = graph_conv(x, adj, weight)
    jax.block_until_ready(out)

    # Reference check in plain JAX (same math as the PyTorch forward).
    ref = jnp.matmul(jnp.matmul(adj, x), weight)
    assert out.shape == (B, N, D_out)
    assert jnp.allclose(out, ref, atol=1e-3, rtol=1e-3), float(
        jnp.max(jnp.abs(out - ref)))

    print("KERNEL_OK")
</pallas_src>

<mosaic_0001>
module attributes {stable_mosaic.version = 11 : i64} {
  func.func @_graph_conv_kernel(%arg0: i32, %arg1: memref<1x16x16xf32, #tpu.memory_space<vmem>>, %arg2: memref<1x16x128xf32, #tpu.memory_space<vmem>>, %arg3: memref<128x128xf32, #tpu.memory_space<vmem>>, %arg4: memref<1x16x128xf32, #tpu.memory_space<vmem>>) attributes {dimension_semantics = [#tpu.dimension_semantics<parallel>], iteration_bounds = array<i64: 2>, scalar_prefetch = 0 : i64, scratch_operands = 0 : i64, tpu.core_type = #tpu.core_type<tc>, window_params = [{transform_indices = @transform_0, window_bounds = array<i64: 1, 16, 16>}, {transform_indices = @transform_1, window_bounds = array<i64: 1, 16, 128>}, {pipeline_mode = #tpu.pipeline_mode<synchronous>, transform_indices = @transform_2, window_bounds = array<i64: 128, 128>}, {transform_indices = @transform_3, window_bounds = array<i64: 1, 16, 128>}]} {
    %c0 = arith.constant 0 : index
    %c0_0 = arith.constant 0 : index
    %c0_1 = arith.constant 0 : index
    %0 = vector.load %arg1[%c0, %c0_0, %c0_1] : memref<1x16x16xf32, #tpu.memory_space<vmem>>, vector<1x16x16xf32>
    %c0_2 = arith.constant 0 : index
    %c0_3 = arith.constant 0 : index
    %c0_4 = arith.constant 0 : index
    %1 = vector.load %arg2[%c0_2, %c0_3, %c0_4] : memref<1x16x128xf32, #tpu.memory_space<vmem>>, vector<1x16x128xf32>
    %c0_5 = arith.constant 0 : index
    %c0_6 = arith.constant 0 : index
    %2 = vector.load %arg3[%c0_5, %c0_6] : memref<128x128xf32, #tpu.memory_space<vmem>>, vector<128x128xf32>
    %3 = vector.shape_cast %1 : vector<1x16x128xf32> to vector<16x128xf32>
    %cst = arith.constant dense<0.000000e+00> : vector<16x128xf32>
    %4 = tpu.matmul %3, %2, %cst {dimension_numbers = #tpu.dot_dimension_numbers<[1], [0], [0], [1], [0, 0, 1, 1], [], []>} : vector<16x128xf32>, vector<128x128xf32>, vector<16x128xf32> -> vector<16x128xf32>
    %5 = vector.shape_cast %4 : vector<16x128xf32> to vector<1x16x128xf32>
    "tpu.trace_start"() <{level = 10 : i32, message = "bij,bjd->bid"}> : () -> ()
    %cst_7 = arith.constant dense<0.000000e+00> : vector<1x16x128xf32>
    %6 = tpu.matmul %0, %5, %cst_7 {dimension_numbers = #tpu.dot_dimension_numbers<[2], [1], [1], [2], [0, 0, 0, 1, 1, 2], [0], [0]>} : vector<1x16x16xf32>, vector<1x16x128xf32>, vector<1x16x128xf32> -> vector<1x16x128xf32>
    "tpu.trace_stop"() : () -> ()
    %c0_8 = arith.constant 0 : index
    %c0_9 = arith.constant 0 : index
    %c0_10 = arith.constant 0 : index
    %7 = vector.load %arg4[%c0_8, %c0_9, %c0_10] : memref<1x16x128xf32, #tpu.memory_space<vmem>>, vector<1x16x128xf32>
    tpu.vector_store %arg4[%c0_8, %c0_9, %c0_10], %6 {strides = array<i32>} : memref<1x16x128xf32, #tpu.memory_space<vmem>>, vector<1x16x128xf32>,
    return
  }
  func.func @transform_0(%arg0: i32) -> (i32, i32, i32) {
    %c0_i32 = arith.constant 0 : i32
    %c0_i32_0 = arith.constant 0 : i32
    %c0_i32_1 = arith.constant 0 : i32
    return %arg0, %c0_i32, %c0_i32_0 : i32, i32, i32
  }
  func.func @transform_1(%arg0: i32) -> (i32, i32, i32) {
    %c0_i32 = arith.constant 0 : i32
    %c0_i32_0 = arith.constant 0 : i32
    %c0_i32_1 = arith.constant 0 : i32
    return %arg0, %c0_i32, %c0_i32_0 : i32, i32, i32
  }
  func.func @transform_2(%arg0: i32) -> (i32, i32) {
    %c0_i32 = arith.constant 0 : i32
    %c0_i32_0 = arith.constant 0 : i32
    %c0_i32_1 = arith.constant 0 : i32
    return %c0_i32, %c0_i32_0 : i32, i32
  }
  func.func @transform_3(%arg0: i32) -> (i32, i32, i32) {
    %c0_i32 = arith.constant 0 : i32
    %c0_i32_0 = arith.constant 0 : i32
    %c0_i32_1 = arith.constant 0 : i32
    return %arg0, %c0_i32, %c0_i32_0 : i32, i32, i32
  }
}

module attributes {stable_mosaic.version = 11 : i64} {
  func.func @_graph_conv_kernel(%arg0: i32, %arg1: memref<1x16x16xf32, #tpu.memory_space<vmem>>, %arg2: memref<1x16x128xf32, #tpu.memory_space<vmem>>, %arg3: memref<128x128xf32, #tpu.memory_space<vmem>>, %arg4: memref<1x16x128xf32, #tpu.memory_space<vmem>>) attributes {dimension_semantics = [#tpu.dimension_semantics<parallel>], iteration_bounds = array<i64: 2>, scalar_prefetch = 0 : i64, scratch_operands = 0 : i64, tpu.core_type = #tpu.core_type<tc>, window_params = [{transform_indices = @transform_0, window_bounds = array<i64: 1, 16, 16>}, {transform_indices = @transform_1, window_bounds = array<i64: 1, 16, 128>}, {pipeline_mode = #tpu.pipeline_mode<synchronous>, transform_indices = @transform_2, window_bounds = array<i64: 128, 128>}, {transform_indices = @transform_3, window_bounds = array<i64: 1, 16, 128>}]} {
    %c0 = arith.constant 0 : index
    %c0_0 = arith.constant 0 : index
    %c0_1 = arith.constant 0 : index
    %0 = vector.load %arg1[%c0, %c0_0, %c0_1] : memref<1x16x16xf32, #tpu.memory_space<vmem>>, vector<1x16x16xf32>
    %c0_2 = arith.constant 0 : index
    %c0_3 = arith.constant 0 : index
    %c0_4 = arith.constant 0 : index
    %1 = vector.load %arg2[%c0_2, %c0_3, %c0_4] : memref<1x16x128xf32, #tpu.memory_space<vmem>>, vector<1x16x128xf32>
    %c0_5 = arith.constant 0 : index
    %c0_6 = arith.constant 0 : index
    %2 = vector.load %arg3[%c0_5, %c0_6] : memref<128x128xf32, #tpu.memory_space<vmem>>, vector<128x128xf32>
    %3 = vector.shape_cast %1 : vector<1x16x128xf32> to vector<16x128xf32>
    %cst = arith.constant dense<0.000000e+00> : vector<16x128xf32>
    %4 = tpu.matmul %3, %2, %cst {dimension_numbers = #tpu.dot_dimension_numbers<[1], [0], [0], [1], [0, 0, 1, 1], [], []>} : vector<16x128xf32>, vector<128x128xf32>, vector<16x128xf32> -> vector<16x128xf32>
    %5 = vector.shape_cast %4 : vector<16x128xf32> to vector<1x16x128xf32>
    "tpu.trace_start"() <{level = 10 : i32, message = "bij,bjd->bid"}> : () -> ()
    %cst_7 = arith.constant dense<0.000000e+00> : vector<1x16x128xf32>
    %6 = tpu.matmul %0, %5, %cst_7 {dimension_numbers = #tpu.dot_dimension_numbers<[2], [1], [1], [2], [0, 0, 0, 1, 1, 2], [0], [0]>} : vector<1x16x16xf32>, vector<1x16x128xf32>, vector<1x16x128xf32> -> vector<1x16x128xf32>
    "tpu.trace_stop"() : () -> ()
    %c0_8 = arith.constant 0 : index
    %c0_9 = arith.constant 0 : index
    %c0_10 = arith.constant 0 : index
    %7 = vector.load %arg4[%c0_8, %c0_9, %c0_10] : memref<1x16x128xf32, #tpu.memory_space<vmem>>, vector<1x16x128xf32>
    tpu.vector_store %arg4[%c0_8, %c0_9, %c0_10], %6 {strides = array<i32>} : memref<1x16x128xf32, #tpu.memory_space<vmem>>, vector<1x16x128xf32>,
    return
  }
  func.func @transform_0(%arg0: i32) -> (i32, i32, i32) {
    %c0_i32 = arith.constant 0 : i32
    %c0_i32_0 = arith.constant 0 : i32
    %c0_i32_1 = arith.constant 0 : i32
    return %arg0, %c0_i32, %c0_i32_0 : i32, i32, i32
  }
  func.func @transform_1(%arg0: i32) -> (i32, i32, i32) {
    %c0_i32 = arith.constant 0 : i32
    %c0_i32_0 = arith.constant 0 : i32
    %c0_i32_1 = arith.constant 0 : i32
    return %arg0, %c0_i32, %c0_i32_0 : i32, i32, i32
  }
  func.func @transform_2(%arg0: i32) -> (i32, i32) {
    %c0_i32 = arith.constant 0 : i32
    %c0_i32_0 = arith.constant 0 : i32
    %c0_i32_1 = arith.constant 0 : i32
    return %c0_i32, %c0_i32_0 : i32, i32
  }
  func.func @transform_3(%arg0: i32) -> (i32, i32, i32) {
    %c0_i32 = arith.constant 0 : i32
    %c0_i32_0 = arith.constant 0 : i32
    %c0_i32_1 = arith.constant 0 : i32
    return %arg0, %c0_i32, %c0_i32_0 : i32, i32, i32
  }
}

</mosaic_0001>

<llo_original>
// kernel: tpu_custom_call.1
$region0: #{tpu_custom_call.1}
  #allocation0 [shape = 'u32[]', space=smem, size = 0x4, offset = 0x4, fixed_abs, tag = 'smem constant byte address 0x4 - core index']
  #allocation1 [shape = 'u32[144,128]{1,0:T(1,128)}', space=vmem, size = 0x12000, scoped, tag = 'internal scratch']
  %s0 = inlined_call_operand.hbm [shape: f32[2,16,16], index: 0, kind: input, shape index: {}]
  %s1 = inlined_call_operand.hbm [shape: f32[2,16,128], index: 1, kind: input, shape index: {}]
  %s2 = inlined_call_operand.hbm [shape: f32[128,128], index: 2, kind: input, shape index: {}]
  %s3 = inlined_call_operand.hbm [shape: f32[2,16,128], index: 3, kind: output, shape index: {}]
  %s4 = sld [smem:[#allocation0]]
  $region57: #{tpu_custom_call.1} parent=0
    _
  %s6 = ssub.s32 1, %s4
  %s7 = scalar_select 0, %s6, %s4
  $region1: #{tpu_custom_call.1} parent=0
    #allocation2 [shape = 'u8[16384]{0}', space=vmem, size = 0x4000, scoped, tag = 'input window, operand 0']
    #allocation3 [shape = 's32[2]{0}', space=sflag, size = 0x8, scoped, tag = 'scoped memory for tpu_custom_call.1']
    #allocation4 [shape = 's32[2]{0}', space=sflag, size = 0x8, scoped, tag = 'scoped memory for tpu_custom_call.1']
    #allocation5 [shape = 'u8[16384]{0}', space=vmem, size = 0x4000, scoped, tag = 'input window, operand 1']
    #allocation6 [shape = 's32[2]{0}', space=sflag, size = 0x8, scoped, tag = 'scoped memory for tpu_custom_call.1']
    #allocation7 [shape = 'u8[65536]{0}', space=vmem, size = 0x10000, scoped, tag = 'input window, operand 2, single buffered']
    #allocation8 [shape = 'u8[16384]{0}', space=vmem, size = 0x4000, scoped, tag = 'output window, operand 0']
    %8 = vsyncpa [#allocation3], 0
    %s9 = scalar_lea.sflag [#allocation3], 1
    %10 = vsyncpa %s9, 0
    %11 = vsyncpa [#allocation6], 0
    %s12 = scalar_lea.sflag [#allocation6], 1
    %13 = vsyncpa %s12, 0
    %14 = vsyncpa [#allocation4], 0
    %s15 = scalar_lea.sflag [#allocation4], 1
    %16 = vsyncpa %s15, 0
    loop: start=0, step=1, limit=4
    $region2: #{tpu_custom_call.1} parent=1 // loop_pre_header
      _
    $region3: #{tpu_custom_call.1} parent=1 // loop_header
      %s18 = sphi 0, %s22
      %p19 = scmp.ge.s32.totalorder %s18, 4
      %s28 = sphi 0, %s30
      %s31 = sphi 0, %s28
      %s32 = sphi 0, %s31
      %s48 = sphi 0, %s32
      %s54 = sphi 0, %s56
      %s57 = sphi 0, %s54
      %s58 = sphi 0, %s57
      %s74 = sphi 0, %s58
      %s78 = sphi 0, %s78
      %s80 = sphi 0, %s78
      %s81 = sphi 0, %s80
      %s95 = sphi 0, %s81
      %s101 = sphi 0, %s103
      %s104 = sphi 0, %s101
      %s105 = sphi 0, %s104
      %s121 = sphi 0, %s105
    $region4: #{tpu_custom_call.1} parent=1 // loop_header_branch
      %21 = sbr.rel (%p19) target = $region8
    $region5: #{tpu_custom_call.1} parent=1 // loop_body
      %s23 = ssub.s32 %s18, 1
      %s24 = ssub.s32 %s18, 2
      %s25 = sadd.s32 %s18, 1
      %s26 = ssub.s32 %s18, %s25
      %p27 = scmp.eq.s32.totalorder %s26, 0
      %s29 = sadd.s32 %s28, 1
      %s30 = scalar_select %p27, %s28, %s29
      %p33 = pneg %p27
      %p34 = scmp.eq.s32.totalorder %s18, 1
      %p35 = por %p33, %p34
      %p36 = scmp.ne.s32.totalorder %s28, %s31
      %p37 = scmp.eq.s32.totalorder %s18, 0
      %p38 = por %p36, %p37
      %p39 = scmp.ne.s32.totalorder %s28, %s31
      %p40 = scmp.eq.s32.totalorder %s23, 1
      %p41 = por %p39, %p40
      %p42 = scmp.ne.s32.totalorder %s31, %s32
      %p43 = scmp.eq.s32.totalorder %s23, 0
      %p44 = por %p42, %p43
      %p45 = scmp.ne.s32.totalorder %s31, %s32
      %p46 = scmp.eq.s32.totalorder %s24, 1
      %p47 = por %p45, %p46
      %p49 = scmp.ne.s32.totalorder %s32, %s48
      %p50 = scmp.eq.s32.totalorder %s24, 0
      %p51 = por %p49, %p50
      %s52 = ssub.s32 %s18, %s25
      %p53 = scmp.eq.s32.totalorder %s52, 0
      %s55 = sadd.s32 %s54, 1
      %s56 = scalar_select %p53, %s54, %s55
      %p59 = pneg %p53
      %p60 = scmp.eq.s32.totalorder %s18, 1
      %p61 = por %p59, %p60
      %p62 = scmp.ne.s32.totalorder %s54, %s57
      %p63 = scmp.eq.s32.totalorder %s18, 0
      %p64 = por %p62, %p63
      %p65 = scmp.ne.s32.totalorder %s54, %s57
      %p66 = scmp.eq.s32.totalorder %s23, 1
      %p67 = por %p65, %p66
      %p68 = scmp.ne.s32.totalorder %s57, %s58
      %p69 = scmp.eq.s32.totalorder %s23, 0
      %p70 = por %p68, %p69
      %p71 = scmp.ne.s32.totalorder %s57, %s58
      %p72 = scmp.eq.s32.totalorder %s24, 1
      %p73 = por %p71, %p72
      %p75 = scmp.ne.s32.totalorder %s58, %s74
      %p76 = scmp.eq.s32.totalorder %s24, 0
      %p77 = por %p75, %p76
      %s79 = sadd.s32 %s78, 1
      %p82 = scmp.eq.s32.totalorder %s18, 1
      %p83 = scmp.ne.s32.totalorder %s78, %s80
      %p84 = scmp.eq.s32.totalorder %s18, 0
      %p85 = por %p83, %p84
      %p86 = scmp.ne.s32.totalorder %s78, %s80
      %p87 = scmp.eq.s32.totalorder %s23, 1
      %p88 = por %p86, %p87
      %p89 = scmp.ne.s32.totalorder %s80, %s81
      %p90 = scmp.eq.s32.totalorder %s23, 0
      %p91 = por %p89, %p90
      %p92 = scmp.ne.s32.totalorder %s80, %s81
      %p93 = scmp.eq.s32.totalorder %s24, 1
      %p94 = por %p92, %p93
      %p96 = scmp.ne.s32.totalorder %s81, %s95
      %p97 = scmp.eq.s32.totalorder %s24, 0
      %p98 = por %p96, %p97
      %s99 = ssub.s32 %s18, %s25
      %p100 = scmp.eq.s32.totalorder %s99, 0
      %s102 = sadd.s32 %s101, 1
      %s103 = scalar_select %p100, %s101, %s102
      %p106 = pneg %p100
      %p107 = scmp.eq.s32.totalorder %s18, 1
      %p108 = por %p106, %p107
      %p109 = scmp.ne.s32.totalorder %s101, %s104
      %p110 = scmp.eq.s32.totalorder %s18, 0
      %p111 = por %p109, %p110
      %p112 = scmp.ne.s32.totalorder %s101, %s104
      %p113 = scmp.eq.s32.totalorder %s23, 1
      %p114 = por %p112, %p113
      %p115 = scmp.ne.s32.totalorder %s104, %s105
      %p116 = scmp.eq.s32.totalorder %s23, 0
      %p117 = por %p115, %p116
      %p118 = scmp.ne.s32.totalorder %s104, %s105
      %p119 = scmp.eq.s32.totalorder %s24, 1
      %p120 = por %p118, %p119
      %p122 = scmp.ne.s32.totalorder %s105, %s121
      %p123 = scmp.eq.s32.totalorder %s24, 0
      %p124 = por %p122, %p123
      %p125 = scmp.le.s32.totalorder 1, %s18
      %p126 = scmp.lt.s32.totalorder %s18, 3
      %p127 = pnand %p125, %p126
      %p128 = pneg %p127
      // Predicated region
      $region9: #{tpu_custom_call.1} parent=5 // pred_check
        _
      $region10: #{tpu_custom_call.1} parent=5 // pred_check_branch
        %130 = sbr.rel (%p127) target = $region12
      $region11: #{tpu_custom_call.1} parent=5 // pred_region
        %s131 = ssub.s32 %s18, 1
        // Predicated region
        $region13: #{tpu_custom_call.1} parent=11 // pred_check
          %p132 = pneg %p91
        $region14: #{tpu_custom_call.1} parent=11 // pred_check_branch
          %134 = sbr.rel (%p132) target = $region16
        $region15: #{tpu_custom_call.1} parent=11 // pred_region
          %s136 = ssub.s32 2048, 2048
          %137 = vsyncadd [#allocation6], %s136
          %s138 = sshll.u32 [#allocation7], 4
          %s139 = int_to_ptr.vmem [resolvable:$true] %s138
          %144 = dma.hbm_to_vmem [thread:$0]  %s2, 2048, %s139, [#allocation6], 128, 128, 8
        $region16: #{tpu_custom_call.1} parent=11 // pred_fallthru
          _
      $region12: #{tpu_custom_call.1} parent=5 // pred_fallthru
        _
      %p145 = scmp.lt.s32.totalorder %s18, 2
      // Predicated region
      $region17: #{tpu_custom_call.1} parent=5 // pred_check
        %p146 = pneg %p145
      $region18: #{tpu_custom_call.1} parent=5 // pred_check_branch
        %148 = sbr.rel (%p146) target = $region20
      $region19: #{tpu_custom_call.1} parent=5 // pred_region
        // Predicated region
        $region21: #{tpu_custom_call.1} parent=19 // pred_check
          %p149 = pneg %p38
        $region22: #{tpu_custom_call.1} parent=19 // pred_check_branch
          %151 = sbr.rel (%p149) target = $region24
        $region23: #{tpu_custom_call.1} parent=19 // pred_region
          %s152 = sand.u32 %s28, 1
          %s153 = scalar_lea.sflag [#allocation3], %s152
          %s154 = sand.u32 %s28, 1
          %s155 = smul.addr %s154, 16
          %s156 = scalar_lea.vmem [#allocation2], %s155
          %s158 = ssub.s32 256, 256
          %159 = vsyncadd %s153, %s158
          %s160 = smul.addr %s18, 2
          %s161 = smul.addr %s160, 128
          %s162 = scalar_lea.hbm %s0, %s161
          %s163 = sshll.u32 %s156, 4
          %s164 = int_to_ptr.vmem [resolvable:$true] %s163
          %169 = dma.hbm_to_vmem [thread:$0]  %s162, 256, %s164, %s153, 128, 128, 8
        $region24: #{tpu_custom_call.1} parent=19 // pred_fallthru
          _
        // Predicated region
        $region25: #{tpu_custom_call.1} parent=19 // pred_check
          %p170 = pneg %p64
        $region26: #{tpu_custom_call.1} parent=19 // pred_check_branch
          %172 = sbr.rel (%p170) target = $region28
        $region27: #{tpu_custom_call.1} parent=19 // pred_region
          %s173 = sand.u32 %s18, 1
          %s174 = scalar_lea.sflag [#allocation6], %s173
          %s175 = sand.u32 %s54, 1
          %s176 = smul.addr %s175, 16
          %s177 = scalar_lea.vmem [#allocation5], %s176
          %s179 = ssub.s32 256, 256
          %180 = vsyncadd %s174, %s179
          %s181 = smul.addr %s18, 2
          %s182 = smul.addr %s181, 128
          %s183 = scalar_lea.hbm %s1, %s182
          %s184 = sshll.u32 %s177, 4
          %s185 = int_to_ptr.vmem [resolvable:$true] %s184
          %190 = dma.hbm_to_vmem [thread:$0]  %s183, 256, %s185, %s174, 128, 128, 8
        $region28: #{tpu_custom_call.1} parent=19 // pred_fallthru
          _
      $region20: #{tpu_custom_call.1} parent=5 // pred_fallthru
        _
      %p191 = scmp.le.s32.totalorder 1, %s18
      %p192 = scmp.lt.s32.totalorder %s18, 3
      %p193 = pnand %p191, %p192
      %p194 = pneg %p193
      // Predicated region
      $region29: #{tpu_custom_call.1} parent=5 // pred_check
        _
      $region30: #{tpu_custom_call.1} parent=5 // pred_check_branch
        %196 = sbr.rel (%p193) target = $region32
      $region31: #{tpu_custom_call.1} parent=5 // pred_region
        %s197 = ssub.s32 %s18, 1
        %s198 = sand.u32 %s31, 1
        %s199 = scalar_lea.sflag [#allocation3], %s198
        %s200 = sand.u32 %s31, 1
        %s201 = smul.addr %s200, 16
        %s202 = scalar_lea.vmem [#allocation2], %s201
        // Predicated region
        $region33: #{tpu_custom_call.1} parent=31 // pred_check
          %p203 = pneg %p44
        $region34: #{tpu_custom_call.1} parent=31 // pred_check_branch
          %205 = sbr.rel (%p203) target = $region36
        $region35: #{tpu_custom_call.1} parent=31 // pred_region
          %206 = dma.done %s199, 256
        $region36: #{tpu_custom_call.1} parent=31 // pred_fallthru
          _
        %s207 = sand.u32 %s23, 1
        %s208 = scalar_lea.sflag [#allocation6], %s207
        %s209 = sand.u32 %s57, 1
        %s210 = smul.addr %s209, 16
        %s211 = scalar_lea.vmem [#allocation5], %s210
        // Predicated region
        $region37: #{tpu_custom_call.1} parent=31 // pred_check
          %p212 = pneg %p70
        $region38: #{tpu_custom_call.1} parent=31 // pred_check_branch
          %214 = sbr.rel (%p212) target = $region40
        $region39: #{tpu_custom_call.1} parent=31 // pred_region
          %215 = dma.done %s208, 256
        $region40: #{tpu_custom_call.1} parent=31 // pred_fallthru
          _
        // Predicated region
        $region41: #{tpu_custom_call.1} parent=31 // pred_check
          %p216 = pneg %p91
        $region42: #{tpu_custom_call.1} parent=31 // pred_check_branch
          %218 = sbr.rel (%p216) target = $region44
        $region43: #{tpu_custom_call.1} parent=31 // pred_region
          %219 = dma.done [#allocation6], 2048
        $region44: #{tpu_custom_call.1} parent=31 // pred_fallthru
          _
        %s220 = sand.u32 %s31, 1
        %s221 = scalar_lea.sflag [#allocation3], %s220
        %s222 = sand.u32 %s31, 1
        %s223 = smul.addr %s222, 16
        %s224 = scalar_lea.vmem [#allocation2], %s223
        %p225 = pneg %p44
        %p226 = pneg %p41
        %s227 = sand.u32 %s23, 1
        %s228 = scalar_lea.sflag [#allocation6], %s227
        %s229 = sand.u32 %s57, 1
        %s230 = smul.addr %s229, 16
        %s231 = scalar_lea.vmem [#allocation5], %s230
        %p232 = pneg %p70
        %p233 = pneg %p67
        %p234 = pneg %p91
        %p235 = pneg %p88
        %p236 = pneg %p117
        %p237 = pneg %p114
        %s238 = sand.u32 %s104, 1
        %s239 = scalar_lea.sflag [#allocation4], %s238
        %s240 = sand.u32 %s104, 1
        %s241 = smul.addr %s240, 16
        %s242 = scalar_lea.vmem [#allocation8], %s241
        %v243 = vld [vmem:[%s202] sm:$0xff]
        %v244 = vld [vmem:[%s202 + $0x8] sm:$0xff]
        %v245 = vld [vmem:[%s211] sm:$0xff]
        %v246 = vld [vmem:[%s211 + $0x8] sm:$0xff]
        %v247 = vld [vmem:[#allocation7] sm:$0xff]
        %v248 = vld [vmem:[#allocation7 + $0x8] sm:$0xff]
        %v249 = vld [vmem:[#allocation7 + $0x10] sm:$0xff]
        %v250 = vld [vmem:[#allocation7 + $0x18] sm:$0xff]
        %v251 = vld [vmem:[#allocation7 + $0x20] sm:$0xff]
        %v252 = vld [vmem:[#allocation7 + $0x28] sm:$0xff]
        %v253 = vld [vmem:[#allocation7 + $0x30] sm:$0xff]
        %v254 = vld [vmem:[#allocation7 + $0x38] sm:$0xff]
        %v255 = vld [vmem:[#allocation7 + $0x40] sm:$0xff]
        %v256 = vld [vmem:[#allocation7 + $0x48] sm:$0xff]
        %v257 = vld [vmem:[#allocation7 + $0x50] sm:$0xff]
        %v258 = vld [vmem:[#allocation7 + $0x58] sm:$0xff]
        %v259 = vld [vmem:[#allocation7 + $0x60] sm:$0xff]
        %v260 = vld [vmem:[#allocation7 + $0x68] sm:$0xff]
        %v261 = vld [vmem:[#allocation7 + $0x70] sm:$0xff]
        %v262 = vld [vmem:[#allocation7 + $0x78] sm:$0xff]
        %263 = vmatprep.subr.mxu0 0.0
        %264 = vmatpush1.msra.mxu0 %v247
        %265 = vmatprep.subr.mxu0 0.0
        %266 = vmatpush1.msra.mxu0 %v248
        %267 = vmatprep.subr.mxu0 0.0
        %268 = vmatpush1.msra.mxu0 %v249
        %269 = vmatprep.subr.mxu0 0.0
        %270 = vmatpush1.msra.mxu0 %v250
        %271 = vmatprep.subr.mxu0 0.0
        %272 = vmatpush1.msra.mxu0 %v251
        %273 = vmatprep.subr.mxu0 0.0
        %274 = vmatpush1.msra.mxu0 %v252
        %275 = vmatprep.subr.mxu0 0.0
        %276 = vmatpush1.msra.mxu0 %v253
        %277 = vmatprep.subr.mxu0 0.0
        %278 = vmatpush1.msra.mxu0 %v254
        %279 = vmatprep.subr.mxu0 0.0
        %280 = vmatpush1.msra.mxu0 %v255
        %281 = vmatprep.subr.mxu0 0.0
        %282 = vmatpush1.msra.mxu0 %v256
        %283 = vmatprep.subr.mxu0 0.0
        %284 = vmatpush1.msra.mxu0 %v257
        %285 = vmatprep.subr.mxu0 0.0
        %286 = vmatpush1.msra.mxu0 %v258
        %287 = vmatprep.subr.mxu0 0.0
        %288 = vmatpush1.msra.mxu0 %v259
        %289 = vmatprep.subr.mxu0 0.0
        %290 = vmatpush1.msra.mxu0 %v260
        %291 = vmatprep.subr.mxu0 0.0
        %292 = vmatpush1.msra.mxu0 %v261
        %293 = vmatprep.subr.mxu0 0.0
        %294 = vmatpush1.msra.mxu0 %v262
        %295 = vmatprep.subr.mxu0 0.0
        %296 = vmatpush1.msra.mxu0 0.0
        %297 = vmatprep.subr.mxu0 0.0
        %298 = vmatpush1.msra.mxu0 0.0
        %299 = vmatprep.subr.mxu0 0.0
        %300 = vmatpush1.msra.mxu0 0.0
        %301 = vmatprep.subr.mxu0 0.0
        %302 = vmatpush1.msra.mxu0 0.0
        %303 = vmatprep.subr.mxu0 0.0
        %304 = vmatpush1.msra.mxu0 0.0
        %305 = vmatprep.subr.mxu0 0.0
        %306 = vmatpush1.msra.mxu0 0.0
        %307 = vmatprep.subr.mxu0 0.0
        %308 = vmatpush1.msra.mxu0 0.0
        %309 = vmatprep.subr.mxu0 0.0
        %310 = vmatpush1.msra.mxu0 0.0
        %311 = vmatprep.subr.mxu0 0.0
        %312 = vmatpush1.msra.mxu0 0.0
        %313 = vmatprep.subr.mxu0 0.0
        %314 = vmatpush1.msra.mxu0 0.0
        %315 = vmatprep.subr.mxu0 0.0
        %316 = vmatpush1.msra.mxu0 0.0
        %317 = vmatprep.subr.mxu0 0.0
        %318 = vmatpush1.msra.mxu0 0.0
        %319 = vmatprep.subr.mxu0 0.0
        %320 = vmatpush1.msra.mxu0 0.0
        %321 = vmatprep.subr.mxu0 0.0
        %322 = vmatpush1.msra.mxu0 0.0
        %323 = vmatprep.subr.mxu0 0.0
        %324 = vmatpush1.msra.mxu0 0.0
        %325 = vmatprep.subr.mxu0 0.0
        %326 = vmatpush1.msra.mxu0 0.0
        %327 = vmatprep.mubr.f32.mxu0 0.0
        %328 = vmatmul.mubr.f32.gmra.mrb[0].mxu0 %v245
        %v329 = vpop.f32.mrb[0].mxu0
        %v330 = vadd.f32 0.0, %v329
        %v331 = vpop.f32.mrb[0].mxu0
        %332 = vmatprep.mubr.f32.mxu0 0.0
        %333 = vmatmul.mubr.f32.gmra.mrb[0].mxu0 %v246
        %v334 = vpop.f32.mrb[0].mxu0
        %v335 = vadd.f32 0.0, %v334
        %v336 = vpop.f32.mrb[0].mxu0
        %337 = vdwg.mxu0
        %vm338 = vcmask 130048
        %v340 = vsel %vm338, %v243, 0
        %v343 = vsel %vm338, %v244, 0
        %345 = vmatprep.subr.mxu0 0.0
        %346 = vmatpush1.msra.mxu0 %v330
        %347 = vmatprep.subr.mxu0 0.0
        %348 = vmatpush1.msra.mxu0 %v335
        %349 = vmatprep.subr.mxu0 0.0
        %350 = vmatpush1.msra.mxu0 0.0
        %351 = vmatprep.subr.mxu0 0.0
        %352 = vmatpush1.msra.mxu0 0.0
        %353 = vmatprep.subr.mxu0 0.0
        %354 = vmatpush1.msra.mxu0 0.0
        %355 = vmatprep.subr.mxu0 0.0
        %356 = vmatpush1.msra.mxu0 0.0
        %357 = vmatprep.subr.mxu0 0.0
        %358 = vmatpush1.msra.mxu0 0.0
        %359 = vmatprep.subr.mxu0 0.0
        %360 = vmatpush1.msra.mxu0 0.0
        %361 = vmatprep.subr.mxu0 0.0
        %362 = vmatpush1.msra.mxu0 0.0
        %363 = vmatprep.subr.mxu0 0.0
        %364 = vmatpush1.msra.mxu0 0.0
        %365 = vmatprep.subr.mxu0 0.0
        %366 = vmatpush1.msra.mxu0 0.0
        %367 = vmatprep.subr.mxu0 0.0
        %368 = vmatpush1.msra.mxu0 0.0
        %369 = vmatprep.subr.mxu0 0.0
        %370 = vmatpush1.msra.mxu0 0.0
        %371 = vmatprep.subr.mxu0 0.0
        %372 = vmatpush1.msra.mxu0 0.0
        %373 = vmatprep.subr.mxu0 0.0
        %374 = vmatpush1.msra.mxu0 0.0
        %375 = vmatprep.subr.mxu0 0.0
        %376 = vmatpush1.msra.mxu0 0.0
        %377 = vmatprep.subr.mxu0 0.0
        %378 = vmatpush1.msra.mxu0 0.0
        %379 = vmatprep.subr.mxu0 0.0
        %380 = vmatpush1.msra.mxu0 0.0
        %381 = vmatprep.subr.mxu0 0.0
        %382 = vmatpush1.msra.mxu0 0.0
        %383 = vmatprep.subr.mxu0 0.0
        %384 = vmatpush1.msra.mxu0 0.0
        %385 = vmatprep.subr.mxu0 0.0
        %386 = vmatpush1.msra.mxu0 0.0
        %387 = vmatprep.subr.mxu0 0.0
        %388 = vmatpush1.msra.mxu0 0.0
        %389 = vmatprep.subr.mxu0 0.0
        %390 = vmatpush1.msra.mxu0 0.0
        %391 = vmatprep.subr.mxu0 0.0
        %392 = vmatpush1.msra.mxu0 0.0
        %393 = vmatprep.subr.mxu0 0.0
        %394 = vmatpush1.msra.mxu0 0.0
        %395 = vmatprep.subr.mxu0 0.0
        %396 = vmatpush1.msra.mxu0 0.0
        %397 = vmatprep.subr.mxu0 0.0
        %398 = vmatpush1.msra.mxu0 0.0
        %399 = vmatprep.subr.mxu0 0.0
        %400 = vmatpush1.msra.mxu0 0.0
        %401 = vmatprep.subr.mxu0 0.0
        %402 = vmatpush1.msra.mxu0 0.0
        %403 = vmatprep.subr.mxu0 0.0
        %404 = vmatpush1.msra.mxu0 0.0
        %405 = vmatprep.subr.mxu0 0.0
        %406 = vmatpush1.msra.mxu0 0.0
        %407 = vmatprep.subr.mxu0 0.0
        %408 = vmatpush1.msra.mxu0 0.0
        %409 = vmatprep.mubr.f32.mxu0 0.0
        %410 = vmatmul.mubr.f32.gmra.mrb[0].mxu0 %v340
        %v411 = vpop.f32.mrb[0].mxu0
        %v412 = vadd.f32 0.0, %v411
        %v413 = vpop.f32.mrb[0].mxu0
        %414 = vmatprep.mubr.f32.mxu0 0.0
        %415 = vmatmul.mubr.f32.gmra.mrb[0].mxu0 %v343
        %v416 = vpop.f32.mrb[0].mxu0
        %v417 = vadd.f32 0.0, %v416
        %v418 = vpop.f32.mrb[0].mxu0
        %419 = vdwg.mxu0
        %420 = vst [vmem:[%s242] sm:$0xff] %v412
        %421 = vst [vmem:[%s242 + $0x8] sm:$0xff] %v417
        %s422 = sand.u32 %s104, 1
        %s423 = scalar_lea.sflag [#allocation4], %s422
        %s424 = sand.u32 %s104, 1
        %s425 = smul.addr %s424, 16
        %s426 = scalar_lea.vmem [#allocation8], %s425
        // Predicated region
        $region45: #{tpu_custom_call.1} parent=31 // pred_check
          %p427 = pneg %p114
        $region46: #{tpu_custom_call.1} parent=31 // pred_check_branch
          %429 = sbr.rel (%p427) target = $region48
        $region47: #{tpu_custom_call.1} parent=31 // pred_region
          %s431 = ssub.s32 256, 256
          %432 = vsyncadd %s423, %s431
          %s433 = smul.addr %s23, 2
          %s434 = smul.addr %s433, 128
          %s435 = scalar_lea.hbm %s3, %s434
          %s436 = sshll.u32 %s426, 4
          %s437 = int_to_ptr.vmem [resolvable:$true] %s436
          %442 = dma.vmem_to_hbm [thread:$0]  %s437, 256, %s435, %s423, 128, 128, 8
        $region48: #{tpu_custom_call.1} parent=31 // pred_fallthru
          _
      $region32: #{tpu_custom_call.1} parent=5 // pred_fallthru
        _
      %p443 = scmp.le.s32.totalorder 2, %s18
      // Predicated region
      $region49: #{tpu_custom_call.1} parent=5 // pred_check
        %p444 = pneg %p443
      $region50: #{tpu_custom_call.1} parent=5 // pred_check_branch
        %446 = sbr.rel (%p444) target = $region52
      $region51: #{tpu_custom_call.1} parent=5 // pred_region
        %s447 = ssub.s32 %s18, 2
        // Predicated region
        $region53: #{tpu_custom_call.1} parent=51 // pred_check
          %p448 = pneg %p120
        $region54: #{tpu_custom_call.1} parent=51 // pred_check_branch
          %450 = sbr.rel (%p448) target = $region56
        $region55: #{tpu_custom_call.1} parent=51 // pred_region
          %s451 = sand.u32 %s105, 1
          %s452 = scalar_lea.sflag [#allocation4], %s451
          %s453 = sand.u32 %s105, 1
          %s454 = smul.addr %s453, 16
          %s455 = scalar_lea.vmem [#allocation8], %s454
          %456 = dma.done %s452, 256
        $region56: #{tpu_custom_call.1} parent=51 // pred_fallthru
          _
      $region52: #{tpu_custom_call.1} parent=5 // pred_fallthru
        _
    $region6: #{tpu_custom_call.1} parent=1 // loop_footer
      %s22 = sadd.s32 1, %s18
    $region7: #{tpu_custom_call.1} parent=1 // loop_footer_branch
      %17 = sbr.rel target = $region3
    $region8: #{tpu_custom_call.1} parent=1 // loop_exit
      _
    %457 = vsyncpa [#allocation3], 1
    %s458 = scalar_lea.sflag [#allocation3], 1
    %459 = vsyncpa %s458, 1
    %460 = vsyncpa [#allocation6], 1
    %s461 = scalar_lea.sflag [#allocation6], 1
    %462 = vsyncpa %s461, 1
    %463 = vsyncpa [#allocation4], 1
    %s464 = scalar_lea.sflag [#allocation4], 1
    %465 = vsyncpa %s464, 1

// kernel: tpu_custom_call.1
$region0: #{tpu_custom_call.1}
  #allocation0 [shape = 'u32[]', space=smem, size = 0x4, offset = 0x4, fixed_abs, tag = 'smem constant byte address 0x4 - core index']
  #allocation1 [shape = 'u32[144,128]{1,0:T(1,128)}', space=vmem, size = 0x12000, scoped, tag = 'internal scratch']
  %s0 = inlined_call_operand.hbm [shape: f32[2,16,16], index: 0, kind: input, shape index: {}]
  %s1 = inlined_call_operand.hbm [shape: f32[2,16,128], index: 1, kind: input, shape index: {}]
  %s2 = inlined_call_operand.hbm [shape: f32[128,128], index: 2, kind: input, shape index: {}]
  %s3 = inlined_call_operand.hbm [shape: f32[2,16,128], index: 3, kind: output, shape index: {}]
  %s4 = sld [smem:[#allocation0]]
  $region57: #{tpu_custom_call.1} parent=0
    _
  %s6 = ssub.s32 1, %s4
  %s7 = scalar_select 0, %s6, %s4
  $region1: #{tpu_custom_call.1} parent=0
    #allocation2 [shape = 'u8[16384]{0}', space=vmem, size = 0x4000, scoped, tag = 'input window, operand 0']
    #allocation3 [shape = 's32[2]{0}', space=sflag, size = 0x8, scoped, tag = 'scoped memory for tpu_custom_call.1']
    #allocation4 [shape = 's32[2]{0}', space=sflag, size = 0x8, scoped, tag = 'scoped memory for tpu_custom_call.1']
    #allocation5 [shape = 'u8[16384]{0}', space=vmem, size = 0x4000, scoped, tag = 'input window, operand 1']
    #allocation6 [shape = 's32[2]{0}', space=sflag, size = 0x8, scoped, tag = 'scoped memory for tpu_custom_call.1']
    #allocation7 [shape = 'u8[65536]{0}', space=vmem, size = 0x10000, scoped, tag = 'input window, operand 2, single buffered']
    #allocation8 [shape = 'u8[16384]{0}', space=vmem, size = 0x4000, scoped, tag = 'output window, operand 0']
    %8 = vsyncpa [#allocation3], 0
    %s9 = scalar_lea.sflag [#allocation3], 1
    %10 = vsyncpa %s9, 0
    %11 = vsyncpa [#allocation6], 0
    %s12 = scalar_lea.sflag [#allocation6], 1
    %13 = vsyncpa %s12, 0
    %14 = vsyncpa [#allocation4], 0
    %s15 = scalar_lea.sflag [#allocation4], 1
    %16 = vsyncpa %s15, 0
    loop: start=0, step=1, limit=4
    $region2: #{tpu_custom_call.1} parent=1 // loop_pre_header
      _
    $region3: #{tpu_custom_call.1} parent=1 // loop_header
      %s18 = sphi 0, %s22
      %p19 = scmp.ge.s32.totalorder %s18, 4
      %s28 = sphi 0, %s30
      %s31 = sphi 0, %s28
      %s32 = sphi 0, %s31
      %s48 = sphi 0, %s32
      %s54 = sphi 0, %s56
      %s57 = sphi 0, %s54
      %s58 = sphi 0, %s57
      %s74 = sphi 0, %s58
      %s78 = sphi 0, %s78
      %s80 = sphi 0, %s78
      %s81 = sphi 0, %s80
      %s95 = sphi 0, %s81
      %s101 = sphi 0, %s103
      %s104 = sphi 0, %s101
      %s105 = sphi 0, %s104
      %s121 = sphi 0, %s105
    $region4: #{tpu_custom_call.1} parent=1 // loop_header_branch
      %21 = sbr.rel (%p19) target = $region8
    $region5: #{tpu_custom_call.1} parent=1 // loop_body
      %s23 = ssub.s32 %s18, 1
      %s24 = ssub.s32 %s18, 2
      %s25 = sadd.s32 %s18, 1
      %s26 = ssub.s32 %s18, %s25
      %p27 = scmp.eq.s32.totalorder %s26, 0
      %s29 = sadd.s32 %s28, 1
      %s30 = scalar_select %p27, %s28, %s29
      %p33 = pneg %p27
      %p34 = scmp.eq.s32.totalorder %s18, 1
      %p35 = por %p33, %p34
      %p36 = scmp.ne.s32.totalorder %s28, %s31
      %p37 = scmp.eq.s32.totalorder %s18, 0
      %p38 = por %p36, %p37
      %p39 = scmp.ne.s32.totalorder %s28, %s31
      %p40 = scmp.eq.s32.totalorder %s23, 1
      %p41 = por %p39, %p40
      %p42 = scmp.ne.s32.totalorder %s31, %s32
      %p43 = scmp.eq.s32.totalorder %s23, 0
      %p44 = por %p42, %p43
      %p45 = scmp.ne.s32.totalorder %s31, %s32
      %p46 = scmp.eq.s32.totalorder %s24, 1
      %p47 = por %p45, %p46
      %p49 = scmp.ne.s32.totalorder %s32, %s48
      %p50 = scmp.eq.s32.totalorder %s24, 0
      %p51 = por %p49, %p50
      %s52 = ssub.s32 %s18, %s25
      %p53 = scmp.eq.s32.totalorder %s52, 0
      %s55 = sadd.s32 %s54, 1
      %s56 = scalar_select %p53, %s54, %s55
      %p59 = pneg %p53
      %p60 = scmp.eq.s32.totalorder %s18, 1
      %p61 = por %p59, %p60
      %p62 = scmp.ne.s32.totalorder %s54, %s57
      %p63 = scmp.eq.s32.totalorder %s18, 0
      %p64 = por %p62, %p63
      %p65 = scmp.ne.s32.totalorder %s54, %s57
      %p66 = scmp.eq.s32.totalorder %s23, 1
      %p67 = por %p65, %p66
      %p68 = scmp.ne.s32.totalorder %s57, %s58
      %p69 = scmp.eq.s32.totalorder %s23, 0
      %p70 = por %p68, %p69
      %p71 = scmp.ne.s32.totalorder %s57, %s58
      %p72 = scmp.eq.s32.totalorder %s24, 1
      %p73 = por %p71, %p72
      %p75 = scmp.ne.s32.totalorder %s58, %s74
      %p76 = scmp.eq.s32.totalorder %s24, 0
      %p77 = por %p75, %p76
      %s79 = sadd.s32 %s78, 1
      %p82 = scmp.eq.s32.totalorder %s18, 1
      %p83 = scmp.ne.s32.totalorder %s78, %s80
      %p84 = scmp.eq.s32.totalorder %s18, 0
      %p85 = por %p83, %p84
      %p86 = scmp.ne.s32.totalorder %s78, %s80
      %p87 = scmp.eq.s32.totalorder %s23, 1
      %p88 = por %p86, %p87
      %p89 = scmp.ne.s32.totalorder %s80, %s81
      %p90 = scmp.eq.s32.totalorder %s23, 0
      %p91 = por %p89, %p90
      %p92 = scmp.ne.s32.totalorder %s80, %s81
      %p93 = scmp.eq.s32.totalorder %s24, 1
      %p94 = por %p92, %p93
      %p96 = scmp.ne.s32.totalorder %s81, %s95
      %p97 = scmp.eq.s32.totalorder %s24, 0
      %p98 = por %p96, %p97
      %s99 = ssub.s32 %s18, %s25
      %p100 = scmp.eq.s32.totalorder %s99, 0
      %s102 = sadd.s32 %s101, 1
      %s103 = scalar_select %p100, %s101, %s102
      %p106 = pneg %p100
      %p107 = scmp.eq.s32.totalorder %s18, 1
      %p108 = por %p106, %p107
      %p109 = scmp.ne.s32.totalorder %s101, %s104
      %p110 = scmp.eq.s32.totalorder %s18, 0
      %p111 = por %p109, %p110
      %p112 = scmp.ne.s32.totalorder %s101, %s104
      %p113 = scmp.eq.s32.totalorder %s23, 1
      %p114 = por %p112, %p113
      %p115 = scmp.ne.s32.totalorder %s104, %s105
      %p116 = scmp.eq.s32.totalorder %s23, 0
      %p117 = por %p115, %p116
      %p118 = scmp.ne.s32.totalorder %s104, %s105
      %p119 = scmp.eq.s32.totalorder %s24, 1
      %p120 = por %p118, %p119
      %p122 = scmp.ne.s32.totalorder %s105, %s121
      %p123 = scmp.eq.s32.totalorder %s24, 0
      %p124 = por %p122, %p123
      %p125 = scmp.le.s32.totalorder 1, %s18
      %p126 = scmp.lt.s32.totalorder %s18, 3
      %p127 = pnand %p125, %p126
      %p128 = pneg %p127
      // Predicated region
      $region9: #{tpu_custom_call.1} parent=5 // pred_check
        _
      $region10: #{tpu_custom_call.1} parent=5 // pred_check_branch
        %130 = sbr.rel (%p127) target = $region12
      $region11: #{tpu_custom_call.1} parent=5 // pred_region
        %s131 = ssub.s32 %s18, 1
        // Predicated region
        $region13: #{tpu_custom_call.1} parent=11 // pred_check
          %p132 = pneg %p91
        $region14: #{tpu_custom_call.1} parent=11 // pred_check_branch
          %134 = sbr.rel (%p132) target = $region16
        $region15: #{tpu_custom_call.1} parent=11 // pred_region
          %s136 = ssub.s32 2048, 2048
          %137 = vsyncadd [#allocation6], %s136
          %s138 = sshll.u32 [#allocation7], 4
          %s139 = int_to_ptr.vmem [resolvable:$true] %s138
          %144 = dma.hbm_to_vmem [thread:$0]  %s2, 2048, %s139, [#allocation6], 128, 128, 8
        $region16: #{tpu_custom_call.1} parent=11 // pred_fallthru
          _
      $region12: #{tpu_custom_call.1} parent=5 // pred_fallthru
        _
      %p145 = scmp.lt.s32.totalorder %s18, 2
      // Predicated region
      $region17: #{tpu_custom_call.1} parent=5 // pred_check
        %p146 = pneg %p145
      $region18: #{tpu_custom_call.1} parent=5 // pred_check_branch
        %148 = sbr.rel (%p146) target = $region20
      $region19: #{tpu_custom_call.1} parent=5 // pred_region
        // Predicated region
        $region21: #{tpu_custom_call.1} parent=19 // pred_check
          %p149 = pneg %p38
        $region22: #{tpu_custom_call.1} parent=19 // pred_check_branch
          %151 = sbr.rel (%p149) target = $region24
        $region23: #{tpu_custom_call.1} parent=19 // pred_region
          %s152 = sand.u32 %s28, 1
          %s153 = scalar_lea.sflag [#allocation3], %s152
          %s154 = sand.u32 %s28, 1
          %s155 = smul.addr %s154, 16
          %s156 = scalar_lea.vmem [#allocation2], %s155
          %s158 = ssub.s32 256, 256
          %159 = vsyncadd %s153, %s158
          %s160 = smul.addr %s18, 2
          %s161 = smul.addr %s160, 128
          %s162 = scalar_lea.hbm %s0, %s161
          %s163 = sshll.u32 %s156, 4
          %s164 = int_to_ptr.vmem [resolvable:$true] %s163
          %169 = dma.hbm_to_vmem [thread:$0]  %s162, 256, %s164, %s153, 128, 128, 8
        $region24: #{tpu_custom_call.1} parent=19 // pred_fallthru
          _
        // Predicated region
        $region25: #{tpu_custom_call.1} parent=19 // pred_check
          %p170 = pneg %p64
        $region26: #{tpu_custom_call.1} parent=19 // pred_check_branch
          %172 = sbr.rel (%p170) target = $region28
        $region27: #{tpu_custom_call.1} parent=19 // pred_region
          %s173 = sand.u32 %s18, 1
          %s174 = scalar_lea.sflag [#allocation6], %s173
          %s175 = sand.u32 %s54, 1
          %s176 = smul.addr %s175, 16
          %s177 = scalar_lea.vmem [#allocation5], %s176
          %s179 = ssub.s32 256, 256
          %180 = vsyncadd %s174, %s179
          %s181 = smul.addr %s18, 2
          %s182 = smul.addr %s181, 128
          %s183 = scalar_lea.hbm %s1, %s182
          %s184 = sshll.u32 %s177, 4
          %s185 = int_to_ptr.vmem [resolvable:$true] %s184
          %190 = dma.hbm_to_vmem [thread:$0]  %s183, 256, %s185, %s174, 128, 128, 8
        $region28: #{tpu_custom_call.1} parent=19 // pred_fallthru
          _
      $region20: #{tpu_custom_call.1} parent=5 // pred_fallthru
        _
      %p191 = scmp.le.s32.totalorder 1, %s18
      %p192 = scmp.lt.s32.totalorder %s18, 3
      %p193 = pnand %p191, %p192
      %p194 = pneg %p193
      // Predicated region
      $region29: #{tpu_custom_call.1} parent=5 // pred_check
        _
      $region30: #{tpu_custom_call.1} parent=5 // pred_check_branch
        %196 = sbr.rel (%p193) target = $region32
      $region31: #{tpu_custom_call.1} parent=5 // pred_region
        %s197 = ssub.s32 %s18, 1
        %s198 = sand.u32 %s31, 1
        %s199 = scalar_lea.sflag [#allocation3], %s198
        %s200 = sand.u32 %s31, 1
        %s201 = smul.addr %s200, 16
        %s202 = scalar_lea.vmem [#allocation2], %s201
        // Predicated region
        $region33: #{tpu_custom_call.1} parent=31 // pred_check
          %p203 = pneg %p44
        $region34: #{tpu_custom_call.1} parent=31 // pred_check_branch
          %205 = sbr.rel (%p203) target = $region36
        $region35: #{tpu_custom_call.1} parent=31 // pred_region
          %206 = dma.done %s199, 256
        $region36: #{tpu_custom_call.1} parent=31 // pred_fallthru
          _
        %s207 = sand.u32 %s23, 1
        %s208 = scalar_lea.sflag [#allocation6], %s207
        %s209 = sand.u32 %s57, 1
        %s210 = smul.addr %s209, 16
        %s211 = scalar_lea.vmem [#allocation5], %s210
        // Predicated region
        $region37: #{tpu_custom_call.1} parent=31 // pred_check
          %p212 = pneg %p70
        $region38: #{tpu_custom_call.1} parent=31 // pred_check_branch
          %214 = sbr.rel (%p212) target = $region40
        $region39: #{tpu_custom_call.1} parent=31 // pred_region
          %215 = dma.done %s208, 256
        $region40: #{tpu_custom_call.1} parent=31 // pred_fallthru
          _
        // Predicated region
        $region41: #{tpu_custom_call.1} parent=31 // pred_check
          %p216 = pneg %p91
        $region42: #{tpu_custom_call.1} parent=31 // pred_check_branch
          %218 = sbr.rel (%p216) target = $region44
        $region43: #{tpu_custom_call.1} parent=31 // pred_region
          %219 = dma.done [#allocation6], 2048
        $region44: #{tpu_custom_call.1} parent=31 // pred_fallthru
          _
        %s220 = sand.u32 %s31, 1
        %s221 = scalar_lea.sflag [#allocation3], %s220
        %s222 = sand.u32 %s31, 1
        %s223 = smul.addr %s222, 16
        %s224 = scalar_lea.vmem [#allocation2], %s223
        %p225 = pneg %p44
        %p226 = pneg %p41
        %s227 = sand.u32 %s23, 1
        %s228 = scalar_lea.sflag [#allocation6], %s227
        %s229 = sand.u32 %s57, 1
        %s230 = smul.addr %s229, 16
        %s231 = scalar_lea.vmem [#allocation5], %s230
        %p232 = pneg %p70
        %p233 = pneg %p67
        %p234 = pneg %p91
        %p235 = pneg %p88
        %p236 = pneg %p117
        %p237 = pneg %p114
        %s238 = sand.u32 %s104, 1
        %s239 = scalar_lea.sflag [#allocation4], %s238
        %s240 = sand.u32 %s104, 1
        %s241 = smul.addr %s240, 16
        %s242 = scalar_lea.vmem [#allocation8], %s241
        %v243 = vld [vmem:[%s202] sm:$0xff]
        %v244 = vld [vmem:[%s202 + $0x8] sm:$0xff]
        %v245 = vld [vmem:[%s211] sm:$0xff]
        %v246 = vld [vmem:[%s211 + $0x8] sm:$0xff]
        %v247 = vld [vmem:[#allocation7] sm:$0xff]
        %v248 = vld [vmem:[#allocation7 + $0x8] sm:$0xff]
        %v249 = vld [vmem:[#allocation7 + $0x10] sm:$0xff]
        %v250 = vld [vmem:[#allocation7 + $0x18] sm:$0xff]
        %v251 = vld [vmem:[#allocation7 + $0x20] sm:$0xff]
        %v252 = vld [vmem:[#allocation7 + $0x28] sm:$0xff]
        %v253 = vld [vmem:[#allocation7 + $0x30] sm:$0xff]
        %v254 = vld [vmem:[#allocation7 + $0x38] sm:$0xff]
        %v255 = vld [vmem:[#allocation7 + $0x40] sm:$0xff]
        %v256 = vld [vmem:[#allocation7 + $0x48] sm:$0xff]
        %v257 = vld [vmem:[#allocation7 + $0x50] sm:$0xff]
        %v258 = vld [vmem:[#allocation7 + $0x58] sm:$0xff]
        %v259 = vld [vmem:[#allocation7 + $0x60] sm:$0xff]
        %v260 = vld [vmem:[#allocation7 + $0x68] sm:$0xff]
        %v261 = vld [vmem:[#allocation7 + $0x70] sm:$0xff]
        %v262 = vld [vmem:[#allocation7 + $0x78] sm:$0xff]
        %263 = vmatprep.subr.mxu0 0.0
        %264 = vmatpush1.msra.mxu0 %v247
        %265 = vmatprep.subr.mxu0 0.0
        %266 = vmatpush1.msra.mxu0 %v248
        %267 = vmatprep.subr.mxu0 0.0
        %268 = vmatpush1.msra.mxu0 %v249
        %269 = vmatprep.subr.mxu0 0.0
        %270 = vmatpush1.msra.mxu0 %v250
        %271 = vmatprep.subr.mxu0 0.0
        %272 = vmatpush1.msra.mxu0 %v251
        %273 = vmatprep.subr.mxu0 0.0
        %274 = vmatpush1.msra.mxu0 %v252
        %275 = vmatprep.subr.mxu0 0.0
        %276 = vmatpush1.msra.mxu0 %v253
        %277 = vmatprep.subr.mxu0 0.0
        %278 = vmatpush1.msra.mxu0 %v254
        %279 = vmatprep.subr.mxu0 0.0
        %280 = vmatpush1.msra.mxu0 %v255
        %281 = vmatprep.subr.mxu0 0.0
        %282 = vmatpush1.msra.mxu0 %v256
        %283 = vmatprep.subr.mxu0 0.0
        %284 = vmatpush1.msra.mxu0 %v257
        %285 = vmatprep.subr.mxu0 0.0
        %286 = vmatpush1.msra.mxu0 %v258
        %287 = vmatprep.subr.mxu0 0.0
        %288 = vmatpush1.msra.mxu0 %v259
        %289 = vmatprep.subr.mxu0 0.0
        %290 = vmatpush1.msra.mxu0 %v260
        %291 = vmatprep.subr.mxu0 0.0
        %292 = vmatpush1.msra.mxu0 %v261
        %293 = vmatprep.subr.mxu0 0.0
        %294 = vmatpush1.msra.mxu0 %v262
        %295 = vmatprep.subr.mxu0 0.0
        %296 = vmatpush1.msra.mxu0 0.0
        %297 = vmatprep.subr.mxu0 0.0
        %298 = vmatpush1.msra.mxu0 0.0
        %299 = vmatprep.subr.mxu0 0.0
        %300 = vmatpush1.msra.mxu0 0.0
        %301 = vmatprep.subr.mxu0 0.0
        %302 = vmatpush1.msra.mxu0 0.0
        %303 = vmatprep.subr.mxu0 0.0
        %304 = vmatpush1.msra.mxu0 0.0
        %305 = vmatprep.subr.mxu0 0.0
        %306 = vmatpush1.msra.mxu0 0.0
        %307 = vmatprep.subr.mxu0 0.0
        %308 = vmatpush1.msra.mxu0 0.0
        %309 = vmatprep.subr.mxu0 0.0
        %310 = vmatpush1.msra.mxu0 0.0
        %311 = vmatprep.subr.mxu0 0.0
        %312 = vmatpush1.msra.mxu0 0.0
        %313 = vmatprep.subr.mxu0 0.0
        %314 = vmatpush1.msra.mxu0 0.0
        %315 = vmatprep.subr.mxu0 0.0
        %316 = vmatpush1.msra.mxu0 0.0
        %317 = vmatprep.subr.mxu0 0.0
        %318 = vmatpush1.msra.mxu0 0.0
        %319 = vmatprep.subr.mxu0 0.0
        %320 = vmatpush1.msra.mxu0 0.0
        %321 = vmatprep.subr.mxu0 0.0
        %322 = vmatpush1.msra.mxu0 0.0
        %323 = vmatprep.subr.mxu0 0.0
        %324 = vmatpush1.msra.mxu0 0.0
        %325 = vmatprep.subr.mxu0 0.0
        %326 = vmatpush1.msra.mxu0 0.0
        %327 = vmatprep.mubr.f32.mxu0 0.0
        %328 = vmatmul.mubr.f32.gmra.mrb[0].mxu0 %v245
        %v329 = vpop.f32.mrb[0].mxu0
        %v330 = vadd.f32 0.0, %v329
        %v331 = vpop.f32.mrb[0].mxu0
        %332 = vmatprep.mubr.f32.mxu0 0.0
        %333 = vmatmul.mubr.f32.gmra.mrb[0].mxu0 %v246
        %v334 = vpop.f32.mrb[0].mxu0
        %v335 = vadd.f32 0.0, %v334
        %v336 = vpop.f32.mrb[0].mxu0
        %337 = vdwg.mxu0
        %vm338 = vcmask 130048
        %v340 = vsel %vm338, %v243, 0
        %v343 = vsel %vm338, %v244, 0
        %345 = vmatprep.subr.mxu0 0.0
        %346 = vmatpush1.msra.mxu0 %v330
        %347 = vmatprep.subr.mxu0 0.0
        %348 = vmatpush1.msra.mxu0 %v335
        %349 = vmatprep.subr.mxu0 0.0
        %350 = vmatpush1.msra.mxu0 0.0
        %351 = vmatprep.subr.mxu0 0.0
        %352 = vmatpush1.msra.mxu0 0.0
        %353 = vmatprep.subr.mxu0 0.0
        %354 = vmatpush1.msra.mxu0 0.0
        %355 = vmatprep.subr.mxu0 0.0
        %356 = vmatpush1.msra.mxu0 0.0
        %357 = vmatprep.subr.mxu0 0.0
        %358 = vmatpush1.msra.mxu0 0.0
        %359 = vmatprep.subr.mxu0 0.0
        %360 = vmatpush1.msra.mxu0 0.0
        %361 = vmatprep.subr.mxu0 0.0
        %362 = vmatpush1.msra.mxu0 0.0
        %363 = vmatprep.subr.mxu0 0.0
        %364 = vmatpush1.msra.mxu0 0.0
        %365 = vmatprep.subr.mxu0 0.0
        %366 = vmatpush1.msra.mxu0 0.0
        %367 = vmatprep.subr.mxu0 0.0
        %368 = vmatpush1.msra.mxu0 0.0
        %369 = vmatprep.subr.mxu0 0.0
        %370 = vmatpush1.msra.mxu0 0.0
        %371 = vmatprep.subr.mxu0 0.0
        %372 = vmatpush1.msra.mxu0 0.0
        %373 = vmatprep.subr.mxu0 0.0
        %374 = vmatpush1.msra.mxu0 0.0
        %375 = vmatprep.subr.mxu0 0.0
        %376 = vmatpush1.msra.mxu0 0.0
        %377 = vmatprep.subr.mxu0 0.0
        %378 = vmatpush1.msra.mxu0 0.0
        %379 = vmatprep.subr.mxu0 0.0
        %380 = vmatpush1.msra.mxu0 0.0
        %381 = vmatprep.subr.mxu0 0.0
        %382 = vmatpush1.msra.mxu0 0.0
        %383 = vmatprep.subr.mxu0 0.0
        %384 = vmatpush1.msra.mxu0 0.0
        %385 = vmatprep.subr.mxu0 0.0
        %386 = vmatpush1.msra.mxu0 0.0
        %387 = vmatprep.subr.mxu0 0.0
        %388 = vmatpush1.msra.mxu0 0.0
        %389 = vmatprep.subr.mxu0 0.0
        %390 = vmatpush1.msra.mxu0 0.0
        %391 = vmatprep.subr.mxu0 0.0
        %392 = vmatpush1.msra.mxu0 0.0
        %393 = vmatprep.subr.mxu0 0.0
        %394 = vmatpush1.msra.mxu0 0.0
        %395 = vmatprep.subr.mxu0 0.0
        %396 = vmatpush1.msra.mxu0 0.0
        %397 = vmatprep.subr.mxu0 0.0
        %398 = vmatpush1.msra.mxu0 0.0
        %399 = vmatprep.subr.mxu0 0.0
        %400 = vmatpush1.msra.mxu0 0.0
        %401 = vmatprep.subr.mxu0 0.0
        %402 = vmatpush1.msra.mxu0 0.0
        %403 = vmatprep.subr.mxu0 0.0
        %404 = vmatpush1.msra.mxu0 0.0
        %405 = vmatprep.subr.mxu0 0.0
        %406 = vmatpush1.msra.mxu0 0.0
        %407 = vmatprep.subr.mxu0 0.0
        %408 = vmatpush1.msra.mxu0 0.0
        %409 = vmatprep.mubr.f32.mxu0 0.0
        %410 = vmatmul.mubr.f32.gmra.mrb[0].mxu0 %v340
        %v411 = vpop.f32.mrb[0].mxu0
        %v412 = vadd.f32 0.0, %v411
        %v413 = vpop.f32.mrb[0].mxu0
        %414 = vmatprep.mubr.f32.mxu0 0.0
        %415 = vmatmul.mubr.f32.gmra.mrb[0].mxu0 %v343
        %v416 = vpop.f32.mrb[0].mxu0
        %v417 = vadd.f32 0.0, %v416
        %v418 = vpop.f32.mrb[0].mxu0
        %419 = vdwg.mxu0
        %420 = vst [vmem:[%s242] sm:$0xff] %v412
        %421 = vst [vmem:[%s242 + $0x8] sm:$0xff] %v417
        %s422 = sand.u32 %s104, 1
        %s423 = scalar_lea.sflag [#allocation4], %s422
        %s424 = sand.u32 %s104, 1
        %s425 = smul.addr %s424, 16
        %s426 = scalar_lea.vmem [#allocation8], %s425
        // Predicated region
        $region45: #{tpu_custom_call.1} parent=31 // pred_check
          %p427 = pneg %p114
        $region46: #{tpu_custom_call.1} parent=31 // pred_check_branch
          %429 = sbr.rel (%p427) target = $region48
        $region47: #{tpu_custom_call.1} parent=31 // pred_region
          %s431 = ssub.s32 256, 256
          %432 = vsyncadd %s423, %s431
          %s433 = smul.addr %s23, 2
          %s434 = smul.addr %s433, 128
          %s435 = scalar_lea.hbm %s3, %s434
          %s436 = sshll.u32 %s426, 4
          %s437 = int_to_ptr.vmem [resolvable:$true] %s436
          %442 = dma.vmem_to_hbm [thread:$0]  %s437, 256, %s435, %s423, 128, 128, 8
        $region48: #{tpu_custom_call.1} parent=31 // pred_fallthru
          _
      $region32: #{tpu_custom_call.1} parent=5 // pred_fallthru
        _
      %p443 = scmp.le.s32.totalorder 2, %s18
      // Predicated region
      $region49: #{tpu_custom_call.1} parent=5 // pred_check
        %p444 = pneg %p443
      $region50: #{tpu_custom_call.1} parent=5 // pred_check_branch
        %446 = sbr.rel (%p444) target = $region52
      $region51: #{tpu_custom_call.1} parent=5 // pred_region
        %s447 = ssub.s32 %s18, 2
        // Predicated region
        $region53: #{tpu_custom_call.1} parent=51 // pred_check
          %p448 = pneg %p120
        $region54: #{tpu_custom_call.1} parent=51 // pred_check_branch
          %450 = sbr.rel (%p448) target = $region56
        $region55: #{tpu_custom_call.1} parent=51 // pred_region
          %s451 = sand.u32 %s105, 1
          %s452 = scalar_lea.sflag [#allocation4], %s451
          %s453 = sand.u32 %s105, 1
          %s454 = smul.addr %s453, 16
          %s455 = scalar_lea.vmem [#allocation8], %s454
          %456 = dma.done %s452, 256
        $region56: #{tpu_custom_call.1} parent=51 // pred_fallthru
          _
      $region52: #{tpu_custom_call.1} parent=5 // pred_fallthru
        _
    $region6: #{tpu_custom_call.1} parent=1 // loop_footer
      %s22 = sadd.s32 1, %s18
    $region7: #{tpu_custom_call.1} parent=1 // loop_footer_branch
      %17 = sbr.rel target = $region3
    $region8: #{tpu_custom_call.1} parent=1 // loop_exit
      _
    %457 = vsyncpa [#allocation3], 1
    %s458 = scalar_lea.sflag [#allocation3], 1
    %459 = vsyncpa %s458, 1
    %460 = vsyncpa [#allocation6], 1
    %s461 = scalar_lea.sflag [#allocation6], 1
    %462 = vsyncpa %s461, 1
    %463 = vsyncpa [#allocation4], 1
    %s464 = scalar_lea.sflag [#allocation4], 1
    %465 = vsyncpa %s464, 1

</llo_original>
